<compile_context>
chip_gen: v7x
topology: tpu7x:2x2x1
jax: 0.10.0
libtpu: 0.0.40
codegen_flags: <defaults>
</compile_context>

<pallas_src>
import functools
import math

import jax
import jax.numpy as jnp
from jax.experimental import pallas as pl
from jax.experimental.pallas import tpu as pltpu

_LANES = 128                          # vreg lane width
_TARGET_BLOCK_BYTES = 4 * 1024 * 1024  # ~4 MiB per (input or output) buffer
_MIN_GRID_STEPS = 4                   # keep both v7x TCs fed + pipeline depth


def _round_up(a, m):
    return ((a + m - 1) // m) * m


def _drop_path_kernel(scale_ref, x_ref, o_ref):
    # scale_ref: (TB, 1, 1) or (TB, 1) f32 — 0.0 or 1/keep_prob per sample.
    # x_ref / o_ref: matching-rank tile of the flattened activation.
    # Multiply in f32, cast the product (keeps bf16/fp16 close to PyTorch's
    # divide-before-rounding; HBM-bound so the upcast is free).
    s = scale_ref[...]
    o_ref[...] = (x_ref[...].astype(jnp.float32) * s).astype(o_ref.dtype)


@functools.partial(jax.jit, static_argnames=("drop_prob", "training"))
def drop_path(x, key, drop_prob=0.0, training=False):
    """Pallas DropPath. x: (B, ...) — one keep/drop decision per leading dim."""
    if drop_prob is None or drop_prob == 0.0 or not training:
        return x

    orig_shape = x.shape
    B = orig_shape[0]
    L = math.prod(orig_shape[1:])
    if B == 0 or L == 0:
        return x

    keep_prob = 1.0 - drop_prob
    itemsize = x.dtype.itemsize

    # Per-sample Bernoulli(keep_prob) mask, exactly floor(keep_prob + U[0,1)).
    u = jax.random.uniform(key, (B,), dtype=jnp.float32)
    mask = jnp.floor(keep_prob + u)                 # 0.0 or 1.0 per sample
    scale = mask * jnp.float32(1.0 / keep_prob)     # fold the 1/keep_prob in

    if L % _LANES == 0:
        # ---------- lane-dense fast path: (B, ...) -> (B, R, 128) ----------
        R = L // _LANES
        x_in = x.reshape(B, R, _LANES)
        scale_in = scale.reshape(B, 1, 1)

        row_bytes = _LANES * itemsize
        tgt_rows = max(8, _TARGET_BLOCK_BYTES // row_bytes)   # 2-byte dtypes
        total_rows = B * R                                    # get 2x rows
        cap_rows = max(8, _round_up(pl.cdiv(total_rows, _MIN_GRID_STEPS), 8))
        blk_rows = min(tgt_rows, cap_rows)

        if R <= blk_rows:
            # One chunk per sample; batch several samples per block.
            TB = max(1, min(B, blk_rows // R))
            TR = R                     # full extent of the row axis — legal
            num_chunks = 1
        else:
            # Balanced row chunks (avoids a tiny, imbalanced tail chunk).
            TB = 1
            num_chunks = pl.cdiv(R, blk_rows)
            TR = _round_up(pl.cdiv(R, num_chunks), 8)
            num_chunks = pl.cdiv(R, TR)

        num_b = pl.cdiv(B, TB)
        block_bytes = TB * TR * _LANES * itemsize
        grid = (num_b, num_chunks)
        in_specs = [
            pl.BlockSpec((TB, 1, 1), lambda b, c: (b, 0, 0)),
            pl.BlockSpec((TB, TR, _LANES), lambda b, c: (b, c, 0)),
        ]
        out_specs = pl.BlockSpec((TB, TR, _LANES), lambda b, c: (b, c, 0))
        dim_sem = ("parallel", "parallel")
        out_shape = jax.ShapeDtypeStruct((B, R, _LANES), x.dtype)
        args = (scale_in, x_in)
    else:
        # ---------- non-128-divisible fallback: (B, L) full-extent lanes ----
        # No jnp.pad / output slice (those cost two extra full HBM passes);
        # the lane-edge partial stores are masked by Pallas instead.
        x_in = x.reshape(B, L)
        scale_in = scale.reshape(B, 1)

        bytes_per_sample = L * itemsize
        tb = max(1, _TARGET_BLOCK_BYTES // bytes_per_sample)
        tb = min(tb, max(1, pl.cdiv(B, _MIN_GRID_STEPS)), B)
        # (8,128) rule: second-to-last block dim must be a multiple of 8 or
        # equal the full batch extent.
        if tb != B:
            tb = B if B <= 8 else max(8, (tb // 8) * 8)
        TB = min(tb, B)

        num_b = pl.cdiv(B, TB)
        block_bytes = TB * L * itemsize
        grid = (num_b,)
        in_specs = [
            pl.BlockSpec((TB, 1), lambda b: (b, 0)),
            pl.BlockSpec((TB, L), lambda b: (b, 0)),
        ]
        out_specs = pl.BlockSpec((TB, L), lambda b: (b, 0))
        dim_sem = ("parallel",)
        out_shape = jax.ShapeDtypeStruct((B, L), x.dtype)
        args = (scale_in, x_in)

    # Explicit scoped-VMEM limit (v5e default is only 16 MiB); 4x block covers
    # double-buffered input + output, plus slack for the tiny scale blocks.
    vmem_limit = int(max(32 * 1024 * 1024, 4 * block_bytes + 2 * 1024 * 1024))

    cost = pl.CostEstimate(
        flops=B * L,
        transcendentals=0,
        bytes_accessed=2 * B * L * itemsize + B * 4,
    )

    out = pl.pallas_call(
        _drop_path_kernel,
        out_shape=out_shape,
        grid=grid,
        in_specs=in_specs,
        out_specs=out_specs,
        compiler_params=pltpu.CompilerParams(
            dimension_semantics=dim_sem,
            vmem_limit_bytes=vmem_limit,
        ),
        cost_estimate=cost,
        # TODO(synk): skip the input DMA for dropped samples (memory_space=
        # pl.ANY + manual double-buffered pltpu.make_async_copy gated by
        # pl.when(scale != 0), zero-fill the output block otherwise). Saves
        # ~drop_prob/2 of HBM bytes but needs manual ragged-tail handling.
        # TODO(synk): add input_output_aliases={1: 0} when the caller actually
        # donates x (otherwise XLA inserts a defensive copy, which is worse).
    )(*args)

    return out.reshape(orig_shape)


class DropPath:
    """Mirror of the nn.Module interface (forward only)."""

    def __init__(self, drop_prob=None):
        self.drop_prob = drop_prob
        self.training = True

    def __call__(self, x, key):
        return drop_path(x, key, drop_prob=self.drop_prob or 0.0,
                         training=self.training)


def _reference(x, key, drop_prob):
    keep_prob = 1.0 - drop_prob
    B = x.shape[0]
    u = jax.random.uniform(key, (B,), dtype=jnp.float32)
    mask = jnp.floor(keep_prob + u)
    bshape = (B,) + (1,) * (x.ndim - 1)
    return x / keep_prob * mask.reshape(bshape)


if __name__ == "__main__":
    key = jax.random.PRNGKey(0)
    k1, k2, k3, k4, k5, k6 = jax.random.split(key, 6)

    # --- case 1: lane-aligned (L % 128 == 0), BEiT-style token tensor --------
    B, N, C = 2, 8, 32
    x = jax.random.normal(k1, (B, N, C), dtype=jnp.float32)
    module = DropPath(drop_prob=0.25)
    y = jax.block_until_ready(module(x, k2))
    y_ref = _reference(x, k2, 0.25)
    assert jnp.allclose(y, y_ref, atol=2e-6), "mismatch vs reference (aligned)"

    # --- case 2: non-128-divisible shape -> full-extent-lane fallback path ---
    x2 = jax.random.normal(k3, (2, 7, 33), dtype=jnp.float32)
    y2 = jax.block_until_ready(drop_path(x2, k4, drop_prob=0.25, training=True))
    assert jnp.allclose(y2, _reference(x2, k4, 0.25), atol=2e-6), \
        "mismatch vs reference (unaligned)"

    # --- case 3: exercises the balanced row-chunking (2D parallel grid) ------
    x3 = jax.random.normal(k5, (2, 24, 128), dtype=jnp.float32)
    y3 = jax.block_until_ready(drop_path(x3, k6, drop_prob=0.4, training=True))
    assert jnp.allclose(y3, _reference(x3, k6, 0.4), atol=2e-6), \
        "mismatch vs reference (chunked)"

    # --- eval path (identity, no kernel launch) -------------------------------
    module.training = False
    y_eval = jax.block_until_ready(module(x, k2))
    assert jnp.allclose(y_eval, x), "eval path must be identity"

    print("KERNEL_OK")
</pallas_src>

<mosaic_0001>
module attributes {stable_mosaic.version = 11 : i64} {
  func.func @_drop_path_kernel(%arg0: i32, %arg1: i32, %arg2: memref<2x1x1xf32, #tpu.memory_space<vmem>>, %arg3: memref<2x2x128xf32, #tpu.memory_space<vmem>>, %arg4: memref<2x2x128xf32, #tpu.memory_space<vmem>>) attributes {dimension_semantics = [#tpu.dimension_semantics<parallel>, #tpu.dimension_semantics<parallel>], iteration_bounds = array<i64: 1, 1>, scalar_prefetch = 0 : i64, scratch_operands = 0 : i64, tpu.core_type = #tpu.core_type<tc>, window_params = [{transform_indices = @transform_0, window_bounds = array<i64: 2, 1, 1>}, {transform_indices = @transform_1, window_bounds = array<i64: 2, 2, 128>}, {transform_indices = @transform_2, window_bounds = array<i64: 2, 2, 128>}]} {
    %c0 = arith.constant 0 : index
    %c0_0 = arith.constant 0 : index
    %c0_1 = arith.constant 0 : index
    %0 = vector.load %arg2[%c0, %c0_0, %c0_1] : memref<2x1x1xf32, #tpu.memory_space<vmem>>, vector<2x1x1xf32>
    %c0_2 = arith.constant 0 : index
    %c0_3 = arith.constant 0 : index
    %c0_4 = arith.constant 0 : index
    %1 = vector.load %arg3[%c0_2, %c0_3, %c0_4] : memref<2x2x128xf32, #tpu.memory_space<vmem>>, vector<2x2x128xf32>
    %2 = vector.broadcast %0 : vector<2x1x1xf32> to vector<2x2x128xf32>
    %3 = arith.mulf %1, %2 : vector<2x2x128xf32>
    %c0_5 = arith.constant 0 : index
    %c0_6 = arith.constant 0 : index
    %c0_7 = arith.constant 0 : index
    %4 = vector.load %arg4[%c0_5, %c0_6, %c0_7] : memref<2x2x128xf32, #tpu.memory_space<vmem>>, vector<2x2x128xf32>
    tpu.vector_store %arg4[%c0_5, %c0_6, %c0_7], %3 {strides = array<i32>} : memref<2x2x128xf32, #tpu.memory_space<vmem>>, vector<2x2x128xf32>,
    return
  }
  func.func @transform_0(%arg0: i32, %arg1: i32) -> (i32, i32, i32) {
    %c0_i32 = arith.constant 0 : i32
    %c0_i32_0 = arith.constant 0 : i32
    %c0_i32_1 = arith.constant 0 : i32
    return %arg0, %c0_i32, %c0_i32_0 : i32, i32, i32
  }
  func.func @transform_1(%arg0: i32, %arg1: i32) -> (i32, i32, i32) {
    %c0_i32 = arith.constant 0 : i32
    %c0_i32_0 = arith.constant 0 : i32
    return %arg0, %arg1, %c0_i32 : i32, i32, i32
  }
  func.func @transform_2(%arg0: i32, %arg1: i32) -> (i32, i32, i32) {
    %c0_i32 = arith.constant 0 : i32
    %c0_i32_0 = arith.constant 0 : i32
    return %arg0, %arg1, %c0_i32 : i32, i32, i32
  }
}

</mosaic_0001>

<llo_original>
// kernel: drop_path.1
$region0: #{drop_path.1}
  #allocation0 [shape = 'u32[]', space=smem, size = 0x4, offset = 0x4, fixed_abs, tag = 'smem constant byte address 0x4 - core index']
  #allocation1 [shape = 'u32[144,128]{1,0:T(1,128)}', space=vmem, size = 0x12000, scoped, tag = 'internal scratch']
  %s0 = inlined_call_operand.vmem [shape: f32[2,1,1], index: 0, kind: input, shape index: {}]
  %s1 = inlined_call_operand.vmem [shape: f32[2,2,128], index: 1, kind: input, shape index: {}]
  %s2 = inlined_call_operand.vmem [shape: f32[2,2,128], index: 2, kind: output, shape index: {}]
  %s3 = sld [smem:[#allocation0]]
  $region18: #{drop_path.1} parent=0
    _
  %s5 = ssub.s32 1, %s3
  %s6 = scalar_select 0, %s5, %s3
  // Predicated region
  $region2: #{drop_path.1} parent=0 // pred_check
    _
  $region3: #{drop_path.1} parent=0 // pred_check_branch
    %8 = sbr.rel (0) target = $region5
  $region4: #{drop_path.1} parent=0 // pred_region
    _
  $region5: #{drop_path.1} parent=0 // pred_fallthru
    _
  // Predicated region
  $region6: #{drop_path.1} parent=0 // pred_check
    _
  $region7: #{drop_path.1} parent=0 // pred_check_branch
    %10 = sbr.rel (0) target = $region9
  $region8: #{drop_path.1} parent=0 // pred_region
    _
  $region9: #{drop_path.1} parent=0 // pred_fallthru
    _
  %v11 = vld [vmem:[%s0] sm:$0x1]
  %v12 = vld [vmem:[%s0 + $0x1] sm:$0x1]
  %v13 = vld [vmem:[%s1] sm:$0x3]
  %v14 = vld [vmem:[%s1 + $0x2] sm:$0x3]
  %v17 = vlaneseq
  %v18 = vshrl.u32 %v17, 7
  %v19 = vsub.s32 0, %v18
  %v20 = vrot.slane %v11, %v19
  %v21 = vlaneseq
  %v22 = vshrl.u32 %v21, 7
  %v23 = vsub.s32 0, %v22
  %v24 = vrot.slane %v12, %v23
  %25 = vset.pattern.permute.xlu0 0
  %26 = vperm.xlu0 %25, %v20
  %v27 = vpop.permute.xlu0 %26
  %29 = vset.pattern.permute.xlu0 0
  %30 = vperm.xlu0 %29, %v24
  %v31 = vpop.permute.xlu0 %30
  %v33 = vmul.f32 %v13, %v27
  %v34 = vmul.f32 %v14, %v31
  %35 = vst [vmem:[%s2] sm:$0x3] %v33
  %36 = vst [vmem:[%s2 + $0x2] sm:$0x3] %v34
  // Predicated region
  $region10: #{drop_path.1} parent=0 // pred_check
    _
  $region11: #{drop_path.1} parent=0 // pred_check_branch
    %38 = sbr.rel (0) target = $region13
  $region12: #{drop_path.1} parent=0 // pred_region
    _
  $region13: #{drop_path.1} parent=0 // pred_fallthru
    _
  // Predicated region
  $region14: #{drop_path.1} parent=0 // pred_check
    _
  $region15: #{drop_path.1} parent=0 // pred_check_branch
    %40 = sbr.rel (0) target = $region17
  $region16: #{drop_path.1} parent=0 // pred_region
    _
  $region17: #{drop_path.1} parent=0 // pred_fallthru
    _

</llo_original>
